<compile_context>
chip_gen: v7x
topology: tpu7x:2x2x1
jax: 0.10.0
libtpu: 0.0.40
codegen_flags: <defaults>
</compile_context>

<pallas_src>
import functools

import jax
import jax.numpy as jnp
from jax.experimental import pallas as pl
from jax.experimental.pallas import tpu as pltpu

_LANE = 1024  # lane-dense last dim (multiple of 128)


def _ipow(t, e: int):
    """t**e for static integer e >= 1 via exponentiation by squaring (VPU only)."""
    result = None
    base = t
    while True:
        if e & 1:
            result = base if result is None else result * base
        e >>= 1
        if e == 0:
            break
        base = base * base
    return result


def _poly_cutoff_kernel(x_ref, o_ref, *, p: float, r_max: float):
    # f32 internal math: numerically consistent across generations (v5e has no
    # bf16 VALU/EUP) and free on a memory-bound kernel.
    x = x_ref[...].astype(jnp.float32)
    t = x * (1.0 / r_max)

    p_int = int(p)
    if float(p_int) == p and p_int >= 1:
        t_p = _ipow(t, p_int)
    else:
        # TODO(synk): non-integer p path only matches jnp.power for t > 0
        # (MACE uses integer p=6); guarded so t <= 0 gives 0 instead of NaN.
        t_p = jnp.where(t > 0.0, jnp.exp(p * jnp.log(jnp.maximum(t, 1e-30))), 0.0)

    c0 = (p + 1.0) * (p + 2.0) / 2.0
    c1 = p * (p + 2.0)
    c2 = p * (p + 1.0) / 2.0

    # envelope = 1 - c0*t^p + c1*t^(p+1) - c2*t^(p+2)
    #          = 1 + t^p * (t*(c1 - c2*t) - c0)         (Horner-factored)
    envelope = 1.0 + t_p * (t * (c1 - c2 * t) - c0)

    # Select instead of compare+cast+multiply (also avoids inf*0 -> NaN).
    o_ref[...] = jnp.where(x < r_max, envelope, 0.0).astype(o_ref.dtype)


def _default_tile_rows_and_vmem_limit():
    """Per-generation block sizing (rows of a 1024-wide f32 slab)."""
    try:
        kind = jax.devices()[0].device_kind.lower()
    except Exception:  # interpret mode / no device info: safe default
        return 512, None
    if "7x" in kind or "v7" in kind:
        # 8 MiB blocks; (in+out) x 2 buffers = 32 MiB -> raise the scoped limit.
        return 2048, 48 << 20
    if "v6" in kind:
        # 4 MiB blocks; 16 MiB total fits the 32 MiB scoped default.
        return 1024, None
    # v5e and anything unknown: 2 MiB blocks fit the 16 MiB scoped default.
    return 512, None


def polynomial_cutoff(x: jax.Array, r_max: float, p: float = 6.0, *,
                      tile_rows: int | None = None) -> jax.Array:
    """Pallas implementation of MACE PolynomialCutoff.forward."""
    orig_shape = x.shape
    dtype = x.dtype

    flat = x.reshape(-1)
    n = flat.shape[0]

    lane = _LANE
    rows = pl.cdiv(n, lane)
    total = rows * lane

    auto_rows, vmem_limit = _default_tile_rows_and_vmem_limit()
    if tile_rows is None:
        tile_rows = auto_rows
    if rows <= tile_rows:
        # Single block == full array: no (8,128) divisibility constraint applies.
        tile_rows = rows
    grid = (pl.cdiv(rows, tile_rows),)  # ragged last block masked by Pallas

    needs_pad = total != n
    if needs_pad:
        # Residual pad is < _LANE elements; allow_input_fusion lets XLA fuse it
        # into the kernel's input DMA instead of a full standalone HBM pass.
        flat = jnp.pad(flat, (0, total - n))
    slab = flat.reshape(rows, lane)

    kernel = functools.partial(_poly_cutoff_kernel, p=float(p), r_max=float(r_max))

    out = pl.pallas_call(
        kernel,
        out_shape=jax.ShapeDtypeStruct((rows, lane), dtype),
        grid_spec=pltpu.PrefetchScalarGridSpec(
            num_scalar_prefetch=0,
            grid=grid,
            in_specs=[pl.BlockSpec((tile_rows, lane), lambda i: (i, 0))],
            out_specs=pl.BlockSpec((tile_rows, lane), lambda i: (i, 0)),
        ),
        compiler_params=pltpu.CompilerParams(
            dimension_semantics=("parallel",),
            allow_input_fusion=[True],
            vmem_limit_bytes=vmem_limit,
        ),
    )(slab)

    out_flat = out.reshape(-1)
    if needs_pad:
        out_flat = out_flat[:n]
    return out_flat.reshape(orig_shape)


def polynomial_cutoff_ref(x: jax.Array, r_max: float, p: float = 6.0) -> jax.Array:
    """Pure-JAX reference (mirrors the PyTorch forward exactly)."""
    xr = x / r_max
    env = (
        1.0
        - (p + 1.0) * (p + 2.0) / 2.0 * jnp.power(xr, p)
        + p * (p + 2.0) * jnp.power(xr, p + 1.0)
        - p * (p + 1.0) / 2.0 * jnp.power(xr, p + 2.0)
    )
    return env * (x < r_max).astype(x.dtype)


if __name__ == "__main__":
    # "Buffers" of the module, initialized deterministically in-script.
    r_max = 5.0
    p = 6.0

    key = jax.random.PRNGKey(0)
    k1, k2, k3 = jax.random.split(key, 3)

    # x: radial distances, e.g. [n_edges, 1] as used in MACE (ragged/pad path).
    x1 = jax.random.uniform(k1, (512, 1), dtype=jnp.float32, minval=0.0, maxval=7.0)
    out1 = jax.block_until_ready(polynomial_cutoff(x1, r_max=r_max, p=p))
    ref1 = polynomial_cutoff_ref(x1, r_max=r_max, p=p)
    assert out1.shape == x1.shape and out1.dtype == x1.dtype
    assert jnp.allclose(out1, ref1, atol=1e-5, rtol=1e-5), float(
        jnp.max(jnp.abs(out1 - ref1))
    )

    # Slab-aligned shape exercises the zero-copy (no pad / no slice) path.
    x2 = jax.random.uniform(k2, (64, 128), dtype=jnp.float32, minval=0.0, maxval=7.0)
    out2 = jax.block_until_ready(polynomial_cutoff(x2, r_max=r_max, p=p))
    ref2 = polynomial_cutoff_ref(x2, r_max=r_max, p=p)
    assert out2.shape == x2.shape and out2.dtype == x2.dtype
    assert jnp.allclose(out2, ref2, atol=1e-5, rtol=1e-5), float(
        jnp.max(jnp.abs(out2 - ref2))
    )

    # Multi-block grid with a ragged (Pallas-masked) last block, via a small
    # tile_rows override so the path is exercised at a small input size.
    x3 = jax.random.uniform(k3, (9000, 1), dtype=jnp.float32, minval=0.0, maxval=7.0)
    out3 = jax.block_until_ready(polynomial_cutoff(x3, r_max=r_max, p=p, tile_rows=8))
    ref3 = polynomial_cutoff_ref(x3, r_max=r_max, p=p)
    assert out3.shape == x3.shape and out3.dtype == x3.dtype
    assert jnp.allclose(out3, ref3, atol=1e-5, rtol=1e-5), float(
        jnp.max(jnp.abs(out3 - ref3))
    )

    print("KERNEL_OK")
</pallas_src>

<mosaic_0001>
module attributes {stable_mosaic.version = 11 : i64} {
  func.func @_poly_cutoff_kernel(%arg0: i32, %arg1: memref<1x1024xf32, #tpu.memory_space<vmem>>, %arg2: memref<1x1024xf32, #tpu.memory_space<vmem>>) attributes {dimension_semantics = [#tpu.dimension_semantics<parallel>], iteration_bounds = array<i64: 1>, scalar_prefetch = 0 : i64, scratch_operands = 0 : i64, tpu.core_type = #tpu.core_type<tc>, window_params = [{transform_indices = @transform_0, window_bounds = array<i64: 1, 1024>}, {transform_indices = @transform_1, window_bounds = array<i64: 1, 1024>}]} {
    %c0 = arith.constant 0 : index
    %c0_0 = arith.constant 0 : index
    %0 = vector.load %arg1[%c0, %c0_0] : memref<1x1024xf32, #tpu.memory_space<vmem>>, vector<1x1024xf32>
    %cst = arith.constant 2.000000e-01 : f32
    %1 = vector.broadcast %cst : f32 to vector<1x1024xf32>
    %2 = arith.mulf %0, %1 : vector<1x1024xf32>
    %3 = arith.mulf %2, %2 : vector<1x1024xf32>
    %4 = arith.mulf %3, %3 : vector<1x1024xf32>
    %5 = arith.mulf %3, %4 : vector<1x1024xf32>
    %cst_1 = arith.constant 2.100000e+01 : f32
    %6 = vector.broadcast %cst_1 : f32 to vector<1x1024xf32>
    %7 = arith.mulf %6, %2 : vector<1x1024xf32>
    %cst_2 = arith.constant 4.800000e+01 : f32
    %8 = vector.broadcast %cst_2 : f32 to vector<1x1024xf32>
    %9 = arith.subf %8, %7 : vector<1x1024xf32>
    %10 = arith.mulf %2, %9 : vector<1x1024xf32>
    %cst_3 = arith.constant 2.800000e+01 : f32
    %11 = vector.broadcast %cst_3 : f32 to vector<1x1024xf32>
    %12 = arith.subf %10, %11 : vector<1x1024xf32>
    %13 = arith.mulf %5, %12 : vector<1x1024xf32>
    %cst_4 = arith.constant 1.000000e+00 : f32
    %14 = vector.broadcast %cst_4 : f32 to vector<1x1024xf32>
    %15 = arith.addf %14, %13 : vector<1x1024xf32>
    %cst_5 = arith.constant 5.000000e+00 : f32
    %16 = vector.broadcast %cst_5 : f32 to vector<1x1024xf32>
    %17 = arith.cmpf olt, %0, %16 : vector<1x1024xf32>
    %cst_6 = arith.constant 0.000000e+00 : f32
    %18 = vector.broadcast %cst_6 : f32 to vector<1x1024xf32>
    %19 = arith.select %17, %15, %18 : vector<1x1024xi1>, vector<1x1024xf32>
    %c0_7 = arith.constant 0 : index
    %c0_8 = arith.constant 0 : index
    %20 = vector.load %arg2[%c0_7, %c0_8] : memref<1x1024xf32, #tpu.memory_space<vmem>>, vector<1x1024xf32>
    tpu.vector_store %arg2[%c0_7, %c0_8], %19 {strides = array<i32>} : memref<1x1024xf32, #tpu.memory_space<vmem>>, vector<1x1024xf32>,
    return
  }
  func.func @transform_0(%arg0: i32) -> (i32, i32) {
    %c0_i32 = arith.constant 0 : i32
    %c0_i32_0 = arith.constant 0 : i32
    return %arg0, %c0_i32 : i32, i32
  }
  func.func @transform_1(%arg0: i32) -> (i32, i32) {
    %c0_i32 = arith.constant 0 : i32
    %c0_i32_0 = arith.constant 0 : i32
    return %arg0, %c0_i32 : i32, i32
  }
}

</mosaic_0001>

<llo_original>
// kernel: tpu_custom_call.1
$region0: #{tpu_custom_call.1}
  #allocation0 [shape = 'u32[]', space=smem, size = 0x4, offset = 0x4, fixed_abs, tag = 'smem constant byte address 0x4 - core index']
  #allocation1 [shape = 'u32[144,128]{1,0:T(1,128)}', space=vmem, size = 0x12000, scoped, tag = 'internal scratch']
  %s0 = inlined_call_operand.hbm [shape: f32[1,1024], index: 0, kind: input, shape index: {}]
  %s1 = inlined_call_operand.hbm [shape: f32[1,1024], index: 1, kind: output, shape index: {}]
  %s2 = sld [smem:[#allocation0]]
  $region18: #{tpu_custom_call.1} parent=0
    _
  %s4 = ssub.s32 1, %s2
  %s5 = scalar_select 0, %s4, %s2
  $region1: #{tpu_custom_call.1} parent=0
    #allocation2 [shape = 'u8[4096]{0}', space=vmem, size = 0x1000, scoped, tag = 'input window, operand 0, single buffered']
    #allocation3 [shape = 's32[1]{0}', space=sflag, size = 0x4, scoped, tag = 'scoped memory for tpu_custom_call.1']
    #allocation4 [shape = 's32[1]{0}', space=sflag, size = 0x4, scoped, tag = 'scoped memory for tpu_custom_call.1']
    #allocation5 [shape = 'u8[4096]{0}', space=vmem, size = 0x1000, scoped, tag = 'output window, operand 0, single buffered']
    %6 = vsyncpa [#allocation3], 0
    %7 = vsyncpa [#allocation4], 0
    // Predicated region
    $region2: #{tpu_custom_call.1} parent=1 // pred_check
      _
    $region3: #{tpu_custom_call.1} parent=1 // pred_check_branch
      %9 = sbr.rel (0) target = $region5
    $region4: #{tpu_custom_call.1} parent=1 // pred_region
      %s11 = ssub.s32 128, 128
      %12 = vsyncadd [#allocation3], %s11
      %s14 = sshll.u32 [#allocation2], 4
      %s15 = int_to_ptr.vmem [resolvable:$true] %s14
      %17 = dma.hbm_to_vmem [thread:$0]  %s0, 128, %s15, [#allocation3]
    $region5: #{tpu_custom_call.1} parent=1 // pred_fallthru
      _
    // Predicated region
    $region6: #{tpu_custom_call.1} parent=1 // pred_check
      _
    $region7: #{tpu_custom_call.1} parent=1 // pred_check_branch
      %19 = sbr.rel (0) target = $region9
    $region8: #{tpu_custom_call.1} parent=1 // pred_region
      %20 = dma.done [#allocation3], 128
    $region9: #{tpu_custom_call.1} parent=1 // pred_fallthru
      _
    %v21 = vld [vmem:[#allocation2] sm:$0xff]
    %v22 = vmul.f32 %v21, 0.2
    %v23 = vmul.f32 %v22, %v22
    %v24 = vmul.f32 %v23, %v23
    %v25 = vmul.f32 %v23, %v24
    %v26 = vmul.f32 %v22, 21.0
    %v27 = vsub.f32 48.0, %v26
    %v28 = vmul.f32 %v22, %v27
    %v29 = vsub.f32 %v28, 28.0
    %v30 = vmul.f32 %v25, %v29
    %v31 = vadd.f32 %v30, 1.0
    %vm32 = vcmp.lt.f32.partialorder %v21, 5.0
    %v33 = vsel %vm32, %v31, 0.0
    %34 = vst [vmem:[#allocation5] sm:$0xff] %v33
    // Predicated region
    $region10: #{tpu_custom_call.1} parent=1 // pred_check
      _
    $region11: #{tpu_custom_call.1} parent=1 // pred_check_branch
      %36 = sbr.rel (0) target = $region13
    $region12: #{tpu_custom_call.1} parent=1 // pred_region
      %s38 = ssub.s32 128, 128
      %39 = vsyncadd [#allocation4], %s38
      %s41 = sshll.u32 [#allocation5], 4
      %s42 = int_to_ptr.vmem [resolvable:$true] %s41
      %44 = dma.vmem_to_hbm [thread:$0]  %s42, 128, %s1, [#allocation4]
    $region13: #{tpu_custom_call.1} parent=1 // pred_fallthru
      _
    // Predicated region
    $region14: #{tpu_custom_call.1} parent=1 // pred_check
      _
    $region15: #{tpu_custom_call.1} parent=1 // pred_check_branch
      %46 = sbr.rel (0) target = $region17
    $region16: #{tpu_custom_call.1} parent=1 // pred_region
      %47 = dma.done [#allocation4], 128
    $region17: #{tpu_custom_call.1} parent=1 // pred_fallthru
      _
    %48 = vsyncpa [#allocation3], 1
    %49 = vsyncpa [#allocation4], 1

</llo_original>
